<compile_context>
chip_gen: v5e
topology: v5e:2x2
jax: 0.10.0
libtpu: 0.0.40
codegen_flags: <defaults>
</compile_context>

<pallas_src>
import math

import jax
import jax.numpy as jnp
from jax.experimental import pallas as pl
from jax.experimental.pallas import tpu as pltpu


LANE = 128   # vreg lane width: all padded dims are multiples of this


def _round_up(n, m):
    return ((n + m - 1) // m) * m


def _pad2d(a, rows, cols):
    r, c = a.shape
    if r == rows and c == cols:
        return a
    return jnp.pad(a, ((0, rows - r), (0, cols - c)))


def _vmem_capacity_bytes():
    """Physical VMEM per core; conservative fallback if the query fails."""
    try:
        return int(pltpu.get_tpu_info().vmem_capacity_bytes)
    except Exception:
        return 64 * 2**20   # v7x per-TC VMEM (smallest of the generations)


# ---------------------------------------------------------------------------
# Fused path: all four GalaLayers in a single kernel, everything in VMEM.
# ---------------------------------------------------------------------------
def _fused_gala_kernel(alpha, compute_dtype):
    cd = compute_dtype
    f32 = jnp.float32

    def kernel(x_ref, asm_ref, asp_ref, w1_ref, w2_ref, w3_ref, w4_ref,
               h1_ref, z_ref, h2_ref, xrec_ref):
        asm = asm_ref[...]
        asp = asp_ref[...]

        # encoder1 + LeakyReLU : h1 = act(asm @ (x @ W1))
        s = jnp.dot(x_ref[...], w1_ref[...], preferred_element_type=f32)
        h1 = jnp.dot(asm, s.astype(cd), preferred_element_type=f32)
        h1 = jnp.where(h1 > 0, h1, alpha * h1)
        h1_ref[...] = h1.astype(h1_ref.dtype)
        # dropout: identity (eval mode)
        # TODO(synk): training-mode dropout mask (pltpu.prng_*) not implemented.

        # encoder2 : z = asm @ (h1 @ W2)
        s = jnp.dot(h1.astype(cd), w2_ref[...], preferred_element_type=f32)
        z = jnp.dot(asm, s.astype(cd), preferred_element_type=f32)
        z_ref[...] = z.astype(z_ref.dtype)

        # decoder1 : h2 = asp @ (z @ W3)
        s = jnp.dot(z.astype(cd), w3_ref[...], preferred_element_type=f32)
        h2 = jnp.dot(asp, s.astype(cd), preferred_element_type=f32)
        h2_ref[...] = h2.astype(h2_ref.dtype)

        # decoder2 + LeakyReLU : x_rec = act(asp @ (h2 @ W4))
        s = jnp.dot(h2.astype(cd), w4_ref[...], preferred_element_type=f32)
        xr = jnp.dot(asp, s.astype(cd), preferred_element_type=f32)
        xr = jnp.where(xr > 0, xr, alpha * xr)
        xrec_ref[...] = xr.astype(xrec_ref.dtype)

    return kernel


def _gala_forward_fused(params, x, asm, asp, *, alpha, compute_dtype):
    N, nfeat = x.shape
    nhid = params["enc1"].shape[1]
    embed = params["enc2"].shape[1]

    Np = _round_up(N, LANE)
    Fp = _round_up(nfeat, LANE)
    Hp = _round_up(nhid, LANE)
    Ep = _round_up(embed, LANE)

    cd = compute_dtype
    xp = _pad2d(x, Np, Fp).astype(cd)
    asmp = _pad2d(asm, Np, Np).astype(cd)
    aspp = _pad2d(asp, Np, Np).astype(cd)
    w1 = _pad2d(params["enc1"], Fp, Hp).astype(cd)
    w2 = _pad2d(params["enc2"], Hp, Ep).astype(cd)
    w3 = _pad2d(params["dec1"], Ep, Hp).astype(cd)
    w4 = _pad2d(params["dec2"], Hp, Fp).astype(cd)

    cd_bytes = jnp.dtype(cd).itemsize
    flops = 2 * Np * (Fp * Hp + Np * Hp      # enc1
                      + Hp * Ep + Np * Ep    # enc2
                      + Ep * Hp + Np * Hp    # dec1
                      + Hp * Fp + Np * Fp)   # dec2
    bytes_accessed = (
        (2 * Np * Np + Np * Fp + Fp * Hp + Hp * Ep + Ep * Hp + Hp * Fp) * cd_bytes
        + Np * (2 * Hp + Ep + Fp) * 4)

    cap = _vmem_capacity_bytes()
    vmem_limit = min(int(cap * 0.85), 100 * 2**20)

    vmem_spec = pl.BlockSpec(memory_space=pltpu.MemorySpace.VMEM)
    out_shapes = (
        jax.ShapeDtypeStruct((Np, Hp), jnp.float32),   # h1
        jax.ShapeDtypeStruct((Np, Ep), jnp.float32),   # z
        jax.ShapeDtypeStruct((Np, Hp), jnp.float32),   # h2
        jax.ShapeDtypeStruct((Np, Fp), jnp.float32),   # x_rec
    )

    h1_p, z_p, h2_p, xr_p = pl.pallas_call(
        _fused_gala_kernel(alpha, cd),
        out_shape=out_shapes,
        in_specs=[vmem_spec] * 7,
        out_specs=(vmem_spec,) * 4,
        compiler_params=pltpu.CompilerParams(vmem_limit_bytes=vmem_limit),
        cost_estimate=pl.CostEstimate(flops=int(flops), transcendentals=0,
                                      bytes_accessed=int(bytes_accessed)),
    )(xp, asmp, aspp, w1, w2, w3, w4)

    return (z_p[:N, :embed], xr_p[:N, :nfeat], h1_p[:N, :nhid], h2_p[:N, :nhid])


# ---------------------------------------------------------------------------
# Tiled path: one fused (support + adjacency) kernel per GalaLayer.
# ---------------------------------------------------------------------------
def _layer_kernel(alpha, apply_act, compute_dtype):
    def kernel(adj_ref, x_ref, w_ref, of32_ref, ocd_ref, acc_ref):
        k = pl.program_id(1)

        @pl.when(k == 0)
        def _init():
            acc_ref[...] = jnp.zeros_like(acc_ref)

        # Support tile (tk, Fout) computed on the fly with W resident in VMEM:
        # the support intermediate never touches HBM.
        sup = jnp.dot(x_ref[...], w_ref[...],
                      preferred_element_type=jnp.float32)
        acc_ref[...] += jnp.dot(adj_ref[...], sup.astype(compute_dtype),
                                preferred_element_type=jnp.float32)

        @pl.when(k == pl.num_programs(1) - 1)
        def _finalize():
            out = acc_ref[...]
            if apply_act:
                out = jnp.where(out > 0, out, alpha * out)   # LeakyReLU (VPU)
            of32_ref[...] = out                              # returned value
            ocd_ref[...] = out.astype(ocd_ref.dtype)         # feeds next layer

    return kernel


def _gala_layer_tiled(x_cd, w_cd, adj_cd, *, alpha, apply_act, compute_dtype):
    Np, Fin = x_cd.shape
    Fout = w_cd.shape[1]
    assert adj_cd.shape == (Np, Np)

    # Row tile: 256 when it divides Np and still leaves >=2 row blocks for
    # megacore; otherwise 128 (full MXU utilization on v5e either way).
    tm = 256 if (Np % 256 == 0 and Np >= 512) else 128
    # Reduction tile over the adjacency columns: as large as divides Np
    # (fewer grid steps, bigger better-hidden DMAs of the only large operand).
    tk = next(c for c in (1024, 512, 256, 128) if Np % c == 0)

    grid = (Np // tm, Np // tk)
    cd_bytes = jnp.dtype(compute_dtype).itemsize
    flops = 2 * Np * Np * Fout + 2 * Np * Fin * Fout * (Np // tm)
    bytes_accessed = ((Np * Np + Np * Fin * (Np // tm) + Fin * Fout) * cd_bytes
                      + Np * Fout * (4 + cd_bytes))
    cap = _vmem_capacity_bytes()

    out_f32, out_cd = pl.pallas_call(
        _layer_kernel(alpha, apply_act, compute_dtype),
        out_shape=(jax.ShapeDtypeStruct((Np, Fout), jnp.float32),
                   jax.ShapeDtypeStruct((Np, Fout), compute_dtype)),
        grid_spec=pltpu.PrefetchScalarGridSpec(
            num_scalar_prefetch=0,
            grid=grid,
            in_specs=[
                pl.BlockSpec((tm, tk), lambda i, k: (i, k)),     # adjacency
                pl.BlockSpec((tk, Fin), lambda i, k: (k, 0)),    # node features
                pl.BlockSpec((Fin, Fout), lambda i, k: (0, 0)),  # weight (VMEM-resident)
            ],
            out_specs=(pl.BlockSpec((tm, Fout), lambda i, k: (i, 0)),
                       pl.BlockSpec((tm, Fout), lambda i, k: (i, 0))),
            scratch_shapes=[pltpu.VMEM((tm, Fout), jnp.float32)]),
        compiler_params=pltpu.CompilerParams(
            dimension_semantics=("parallel", "arbitrary"),
            vmem_limit_bytes=min(cap // 2, 64 * 2**20)),
        cost_estimate=pl.CostEstimate(flops=int(flops), transcendentals=0,
                                      bytes_accessed=int(bytes_accessed)),
    )(adj_cd, x_cd, w_cd)
    return out_f32, out_cd


def _gala_forward_tiled(params, x, asm, asp, *, alpha, compute_dtype):
    N, nfeat = x.shape
    nhid = params["enc1"].shape[1]
    embed = params["enc2"].shape[1]

    # Pad everything to 128 only (not 256): lane-dense, no inflated MXU work
    # for the small feature dims, and far less padded adjacency traffic.
    Np = _round_up(N, LANE)
    Fp = _round_up(nfeat, LANE)
    Hp = _round_up(nhid, LANE)
    Ep = _round_up(embed, LANE)

    cd = compute_dtype
    x_cd = _pad2d(x, Np, Fp).astype(cd)
    asm_cd = _pad2d(asm, Np, Np).astype(cd)
    asp_cd = _pad2d(asp, Np, Np).astype(cd)
    w1 = _pad2d(params["enc1"], Fp, Hp).astype(cd)
    w2 = _pad2d(params["enc2"], Hp, Ep).astype(cd)
    w3 = _pad2d(params["dec1"], Ep, Hp).astype(cd)
    w4 = _pad2d(params["dec2"], Hp, Fp).astype(cd)

    h1, h1_cd = _gala_layer_tiled(x_cd, w1, asm_cd, alpha=alpha,
                                  apply_act=True, compute_dtype=cd)
    # dropout: identity (eval mode).  TODO(synk): training-mode dropout mask.
    z, z_cd = _gala_layer_tiled(h1_cd, w2, asm_cd, alpha=alpha,
                                apply_act=False, compute_dtype=cd)
    h2, h2_cd = _gala_layer_tiled(z_cd, w3, asp_cd, alpha=alpha,
                                  apply_act=False, compute_dtype=cd)
    x_rec, _ = _gala_layer_tiled(h2_cd, w4, asp_cd, alpha=alpha,
                                 apply_act=True, compute_dtype=cd)

    return (z[:N, :embed], x_rec[:N, :nfeat], h1[:N, :nhid], h2[:N, :nhid])


# ---------------------------------------------------------------------------
# Public forward + init + pure-JAX reference
# ---------------------------------------------------------------------------
def gala_forward(params, x, asm, asp, *, alpha=0.2,
                 compute_dtype=jnp.bfloat16, force_tiled=False):
    """Reproduces GaLa.forward: returns (z, x_recon, h1, h2)."""
    N, nfeat = x.shape
    nhid = params["enc1"].shape[1]
    embed = params["enc2"].shape[1]
    Np, Fp, Hp, Ep = (_round_up(N, LANE), _round_up(nfeat, LANE),
                      _round_up(nhid, LANE), _round_up(embed, LANE))
    cd_bytes = jnp.dtype(compute_dtype).itemsize
    maxd = max(Fp, Hp, Ep)
    # Fused-path live-VMEM estimate: bf16 inputs + f32 outputs + in-kernel f32
    # temporaries (support + layer result) + their bf16 recasts.
    fused_bytes = (
        (2 * Np * Np + Np * Fp + Fp * Hp + Hp * Ep + Ep * Hp + Hp * Fp) * cd_bytes
        + Np * (2 * Hp + Ep + Fp) * 4
        + Np * maxd * (2 * 4 + cd_bytes))
    cap = _vmem_capacity_bytes()
    # Fused only when it comfortably fits one core's VMEM (generation-aware)
    # AND the graph is small enough that keeping the second v7x TensorCore
    # idle costs less than the launch/HBM savings; otherwise per-layer tiled.
    use_fused = ((not force_tiled)
                 and fused_bytes <= int(0.6 * cap)
                 and Np <= 1024)
    if use_fused:
        return _gala_forward_fused(params, x, asm, asp, alpha=alpha,
                                   compute_dtype=compute_dtype)
    return _gala_forward_tiled(params, x, asm, asp, alpha=alpha,
                               compute_dtype=compute_dtype)


def init_gala_params(key, nfeat, nhid, embed):
    """Matches GalaLayer.reset_parameters: W ~ U(-stdv, stdv), stdv=1/sqrt(out)."""
    def init_w(k, fan_in, fan_out):
        stdv = 1.0 / math.sqrt(fan_out)
        return jax.random.uniform(k, (fan_in, fan_out),
                                  minval=-stdv, maxval=stdv, dtype=jnp.float32)
    k1, k2, k3, k4 = jax.random.split(key, 4)
    return {
        "enc1": init_w(k1, nfeat, nhid),
        "enc2": init_w(k2, nhid, embed),
        "dec1": init_w(k3, embed, nhid),
        "dec2": init_w(k4, nhid, nfeat),
    }


def gala_forward_ref(params, x, asm, asp, *, alpha=0.2,
                     compute_dtype=jnp.bfloat16):
    """Pure-JAX reference with the same cast points (bf16 operands, f32 acc)."""
    cd = compute_dtype
    asm_cd = asm.astype(cd)
    asp_cd = asp.astype(cd)

    def layer(xx_cd, w, adj_cd, act):
        s = jnp.dot(xx_cd, w.astype(cd),
                    preferred_element_type=jnp.float32).astype(cd)
        out = jnp.dot(adj_cd, s, preferred_element_type=jnp.float32)
        if act:
            out = jnp.where(out > 0, out, alpha * out)
        return out

    h1 = layer(x.astype(cd), params["enc1"], asm_cd, True)
    z = layer(h1.astype(cd), params["enc2"], asm_cd, False)
    h2 = layer(z.astype(cd), params["dec1"], asp_cd, False)
    x_rec = layer(h2.astype(cd), params["dec2"], asp_cd, True)
    return z, x_rec, h1, h2


if __name__ == "__main__":
    alpha = 0.2
    key = jax.random.PRNGKey(0)

    def make_inputs(k, N, nfeat, nhid, embed):
        kx, ka1, ka2, kp = jax.random.split(k, 4)
        x = jax.random.normal(kx, (N, nfeat), dtype=jnp.float32)
        asm = jax.random.uniform(ka1, (N, N), dtype=jnp.float32)
        asp = jax.random.uniform(ka2, (N, N), dtype=jnp.float32)
        asm = asm / jnp.sum(asm, axis=1, keepdims=True)   # row-normalize
        asp = asp / jnp.sum(asp, axis=1, keepdims=True)
        params = init_gala_params(kp, nfeat, nhid, embed)
        return params, x, asm, asp

    def check(params, x, asm, asp, force_tiled):
        outs = gala_forward(params, x, asm, asp, alpha=alpha,
                            compute_dtype=jnp.bfloat16, force_tiled=force_tiled)
        outs = jax.block_until_ready(outs)
        refs = gala_forward_ref(params, x, asm, asp, alpha=alpha,
                                compute_dtype=jnp.bfloat16)
        for got, want in zip(outs, refs):
            assert got.shape == want.shape, (got.shape, want.shape)
            assert jnp.allclose(got, want, atol=1e-3, rtol=1e-3)

    k1, k2 = jax.random.split(key)

    # Case 1: small graph -> fully fused single-kernel path.
    check(*make_inputs(k1, N=8, nfeat=32, nhid=16, embed=8), force_tiled=False)

    # Case 2: exercise the per-layer fused-support tiled pipeline path.
    check(*make_inputs(k2, N=300, nfeat=200, nhid=64, embed=32), force_tiled=True)

    print("KERNEL_OK")
</pallas_src>

<mosaic_0001>
module attributes {stable_mosaic.version = 11 : i64} {
  func.func @kernel(%arg0: memref<128x128xbf16, #tpu.memory_space<vmem>>, %arg1: memref<128x128xbf16, #tpu.memory_space<vmem>>, %arg2: memref<128x128xbf16, #tpu.memory_space<vmem>>, %arg3: memref<128x128xbf16, #tpu.memory_space<vmem>>, %arg4: memref<128x128xbf16, #tpu.memory_space<vmem>>, %arg5: memref<128x128xbf16, #tpu.memory_space<vmem>>, %arg6: memref<128x128xbf16, #tpu.memory_space<vmem>>, %arg7: memref<128x128xf32, #tpu.memory_space<vmem>>, %arg8: memref<128x128xf32, #tpu.memory_space<vmem>>, %arg9: memref<128x128xf32, #tpu.memory_space<vmem>>, %arg10: memref<128x128xf32, #tpu.memory_space<vmem>>) attributes {dimension_semantics = [], scalar_prefetch = 0 : i64, scratch_operands = 0 : i64, tpu.core_type = #tpu.core_type<tc>} {
    %c0 = arith.constant 0 : index
    %c0_0 = arith.constant 0 : index
    %0 = vector.load %arg1[%c0, %c0_0] : memref<128x128xbf16, #tpu.memory_space<vmem>>, vector<128x128xbf16>
    %c0_1 = arith.constant 0 : index
    %c0_2 = arith.constant 0 : index
    %1 = vector.load %arg2[%c0_1, %c0_2] : memref<128x128xbf16, #tpu.memory_space<vmem>>, vector<128x128xbf16>
    %c0_3 = arith.constant 0 : index
    %c0_4 = arith.constant 0 : index
    %2 = vector.load %arg0[%c0_3, %c0_4] : memref<128x128xbf16, #tpu.memory_space<vmem>>, vector<128x128xbf16>
    %c0_5 = arith.constant 0 : index
    %c0_6 = arith.constant 0 : index
    %3 = vector.load %arg3[%c0_5, %c0_6] : memref<128x128xbf16, #tpu.memory_space<vmem>>, vector<128x128xbf16>
    %cst = arith.constant dense<0.000000e+00> : vector<128x128xf32>
    %4 = tpu.matmul %2, %3, %cst {dimension_numbers = #tpu.dot_dimension_numbers<[1], [0], [0], [1], [0, 0, 1, 1], [], []>} : vector<128x128xbf16>, vector<128x128xbf16>, vector<128x128xf32> -> vector<128x128xf32>
    %5 = arith.truncf %4 : vector<128x128xf32> to vector<128x128xbf16>
    %cst_7 = arith.constant dense<0.000000e+00> : vector<128x128xf32>
    %6 = tpu.matmul %0, %5, %cst_7 {dimension_numbers = #tpu.dot_dimension_numbers<[1], [0], [0], [1], [0, 0, 1, 1], [], []>} : vector<128x128xbf16>, vector<128x128xbf16>, vector<128x128xf32> -> vector<128x128xf32>
    %cst_8 = arith.constant 0.000000e+00 : f32
    %7 = vector.broadcast %cst_8 : f32 to vector<128x128xf32>
    %8 = arith.cmpf ogt, %6, %7 : vector<128x128xf32>
    %cst_9 = arith.constant 2.000000e-01 : f32
    %9 = vector.broadcast %cst_9 : f32 to vector<128x128xf32>
    %10 = arith.mulf %9, %6 : vector<128x128xf32>
    %11 = arith.select %8, %6, %10 : vector<128x128xi1>, vector<128x128xf32>
    %c0_10 = arith.constant 0 : index
    %c0_11 = arith.constant 0 : index
    %12 = vector.load %arg7[%c0_10, %c0_11] : memref<128x128xf32, #tpu.memory_space<vmem>>, vector<128x128xf32>
    tpu.vector_store %arg7[%c0_10, %c0_11], %11 {strides = array<i32>} : memref<128x128xf32, #tpu.memory_space<vmem>>, vector<128x128xf32>,
    %13 = arith.truncf %11 : vector<128x128xf32> to vector<128x128xbf16>
    %c0_12 = arith.constant 0 : index
    %c0_13 = arith.constant 0 : index
    %14 = vector.load %arg4[%c0_12, %c0_13] : memref<128x128xbf16, #tpu.memory_space<vmem>>, vector<128x128xbf16>
    %cst_14 = arith.constant dense<0.000000e+00> : vector<128x128xf32>
    %15 = tpu.matmul %13, %14, %cst_14 {dimension_numbers = #tpu.dot_dimension_numbers<[1], [0], [0], [1], [0, 0, 1, 1], [], []>} : vector<128x128xbf16>, vector<128x128xbf16>, vector<128x128xf32> -> vector<128x128xf32>
    %16 = arith.truncf %15 : vector<128x128xf32> to vector<128x128xbf16>
    %cst_15 = arith.constant dense<0.000000e+00> : vector<128x128xf32>
    %17 = tpu.matmul %0, %16, %cst_15 {dimension_numbers = #tpu.dot_dimension_numbers<[1], [0], [0], [1], [0, 0, 1, 1], [], []>} : vector<128x128xbf16>, vector<128x128xbf16>, vector<128x128xf32> -> vector<128x128xf32>
    %c0_16 = arith.constant 0 : index
    %c0_17 = arith.constant 0 : index
    %18 = vector.load %arg8[%c0_16, %c0_17] : memref<128x128xf32, #tpu.memory_space<vmem>>, vector<128x128xf32>
    tpu.vector_store %arg8[%c0_16, %c0_17], %17 {strides = array<i32>} : memref<128x128xf32, #tpu.memory_space<vmem>>, vector<128x128xf32>,
    %19 = arith.truncf %17 : vector<128x128xf32> to vector<128x128xbf16>
    %c0_18 = arith.constant 0 : index
    %c0_19 = arith.constant 0 : index
    %20 = vector.load %arg5[%c0_18, %c0_19] : memref<128x128xbf16, #tpu.memory_space<vmem>>, vector<128x128xbf16>
    %cst_20 = arith.constant dense<0.000000e+00> : vector<128x128xf32>
    %21 = tpu.matmul %19, %20, %cst_20 {dimension_numbers = #tpu.dot_dimension_numbers<[1], [0], [0], [1], [0, 0, 1, 1], [], []>} : vector<128x128xbf16>, vector<128x128xbf16>, vector<128x128xf32> -> vector<128x128xf32>
    %22 = arith.truncf %21 : vector<128x128xf32> to vector<128x128xbf16>
    %cst_21 = arith.constant dense<0.000000e+00> : vector<128x128xf32>
    %23 = tpu.matmul %1, %22, %cst_21 {dimension_numbers = #tpu.dot_dimension_numbers<[1], [0], [0], [1], [0, 0, 1, 1], [], []>} : vector<128x128xbf16>, vector<128x128xbf16>, vector<128x128xf32> -> vector<128x128xf32>
    %c0_22 = arith.constant 0 : index
    %c0_23 = arith.constant 0 : index
    %24 = vector.load %arg9[%c0_22, %c0_23] : memref<128x128xf32, #tpu.memory_space<vmem>>, vector<128x128xf32>
    tpu.vector_store %arg9[%c0_22, %c0_23], %23 {strides = array<i32>} : memref<128x128xf32, #tpu.memory_space<vmem>>, vector<128x128xf32>,
    %25 = arith.truncf %23 : vector<128x128xf32> to vector<128x128xbf16>
    %c0_24 = arith.constant 0 : index
    %c0_25 = arith.constant 0 : index
    %26 = vector.load %arg6[%c0_24, %c0_25] : memref<128x128xbf16, #tpu.memory_space<vmem>>, vector<128x128xbf16>
    %cst_26 = arith.constant dense<0.000000e+00> : vector<128x128xf32>
    %27 = tpu.matmul %25, %26, %cst_26 {dimension_numbers = #tpu.dot_dimension_numbers<[1], [0], [0], [1], [0, 0, 1, 1], [], []>} : vector<128x128xbf16>, vector<128x128xbf16>, vector<128x128xf32> -> vector<128x128xf32>
    %28 = arith.truncf %27 : vector<128x128xf32> to vector<128x128xbf16>
    %cst_27 = arith.constant dense<0.000000e+00> : vector<128x128xf32>
    %29 = tpu.matmul %1, %28, %cst_27 {dimension_numbers = #tpu.dot_dimension_numbers<[1], [0], [0], [1], [0, 0, 1, 1], [], []>} : vector<128x128xbf16>, vector<128x128xbf16>, vector<128x128xf32> -> vector<128x128xf32>
    %cst_28 = arith.constant 0.000000e+00 : f32
    %30 = vector.broadcast %cst_28 : f32 to vector<128x128xf32>
    %31 = arith.cmpf ogt, %29, %30 : vector<128x128xf32>
    %cst_29 = arith.constant 2.000000e-01 : f32
    %32 = vector.broadcast %cst_29 : f32 to vector<128x128xf32>
    %33 = arith.mulf %32, %29 : vector<128x128xf32>
    %34 = arith.select %31, %29, %33 : vector<128x128xi1>, vector<128x128xf32>
    %c0_30 = arith.constant 0 : index
    %c0_31 = arith.constant 0 : index
    %35 = vector.load %arg10[%c0_30, %c0_31] : memref<128x128xf32, #tpu.memory_space<vmem>>, vector<128x128xf32>
    tpu.vector_store %arg10[%c0_30, %c0_31], %34 {strides = array<i32>} : memref<128x128xf32, #tpu.memory_space<vmem>>, vector<128x128xf32>,
    return
  }
}

</mosaic_0001>

<llo_original>
// kernel: tpu_custom_call.1
$region0: #{tpu_custom_call.1}
  #allocation0 [shape = 'u32[]', space=smem, size = 0x4, offset = 0x4, fixed_abs, tag = 'smem constant byte address 0x4 - core index']
  #allocation1 [shape = 'u32[72,128]{1,0:T(1,128)}', space=vmem, size = 0x9000, scoped, tag = 'internal scratch']
  %s0 = inlined_call_operand.hbm [shape: bf16[128,128], index: 0, kind: input, shape index: {}]
  %s1 = inlined_call_operand.hbm [shape: bf16[128,128], index: 1, kind: input, shape index: {}]
  %s2 = inlined_call_operand.hbm [shape: bf16[128,128], index: 2, kind: input, shape index: {}]
  %s3 = inlined_call_operand.hbm [shape: bf16[128,128], index: 3, kind: input, shape index: {}]
  %s4 = inlined_call_operand.hbm [shape: bf16[128,128], index: 4, kind: input, shape index: {}]
  %s5 = inlined_call_operand.hbm [shape: bf16[128,128], index: 5, kind: input, shape index: {}]
  %s6 = inlined_call_operand.hbm [shape: bf16[128,128], index: 6, kind: input, shape index: {}]
  %s7 = inlined_call_operand.hbm [shape: f32[128,128], index: 7, kind: output, shape index: {0}]
  %s8 = inlined_call_operand.hbm [shape: f32[128,128], index: 8, kind: output, shape index: {1}]
  %s9 = inlined_call_operand.hbm [shape: f32[128,128], index: 9, kind: output, shape index: {2}]
  %s10 = inlined_call_operand.hbm [shape: f32[128,128], index: 10, kind: output, shape index: {3}]
  %11 = xla_tuple %s7, %s8, %s9, %s10
  %s12 = sld [smem:[#allocation0]]
  $region90: #{tpu_custom_call.1} parent=0
    _
  %s14 = ssub.s32 1, %s12
  %s15 = scalar_select 0, %s14, %s12
  $region1: #{tpu_custom_call.1} parent=0
    #allocation2 [shape = 'u8[32768]{0}', space=vmem, size = 0x8000, scoped, tag = 'input window, operand 0, single buffered']
    #allocation3 [shape = 's32[1]{0}', space=sflag, size = 0x4, scoped, tag = 'scoped memory for tpu_custom_call.1']
    #allocation4 [shape = 's32[1]{0}', space=sflag, size = 0x4, scoped, tag = 'scoped memory for tpu_custom_call.1']
    #allocation5 [shape = 'u8[32768]{0}', space=vmem, size = 0x8000, scoped, tag = 'input window, operand 1, single buffered']
    #allocation6 [shape = 's32[1]{0}', space=sflag, size = 0x4, scoped, tag = 'scoped memory for tpu_custom_call.1']
    #allocation7 [shape = 'u8[32768]{0}', space=vmem, size = 0x8000, scoped, tag = 'input window, operand 2, single buffered']
    #allocation8 [shape = 'u8[32768]{0}', space=vmem, size = 0x8000, scoped, tag = 'input window, operand 3, single buffered']
    #allocation9 [shape = 's32[1]{0}', space=sflag, size = 0x4, scoped, tag = 'scoped memory for tpu_custom_call.1']
    #allocation10 [shape = 'u8[32768]{0}', space=vmem, size = 0x8000, scoped, tag = 'input window, operand 4, single buffered']
    #allocation11 [shape = 'u8[32768]{0}', space=vmem, size = 0x8000, scoped, tag = 'input window, operand 5, single buffered']
    #allocation12 [shape = 's32[1]{0}', space=sflag, size = 0x4, scoped, tag = 'scoped memory for tpu_custom_call.1']
    #allocation13 [shape = 'u8[32768]{0}', space=vmem, size = 0x8000, scoped, tag = 'input window, operand 6, single buffered']
    #allocation14 [shape = 'u8[65536]{0}', space=vmem, size = 0x10000, scoped, tag = 'output window, operand 0, single buffered']
    #allocation15 [shape = 'u8[65536]{0}', space=vmem, size = 0x10000, scoped, tag = 'output window, operand 1, single buffered']
    #allocation16 [shape = 's32[1]{0}', space=sflag, size = 0x4, scoped, tag = 'scoped memory for tpu_custom_call.1']
    #allocation17 [shape = 'u8[65536]{0}', space=vmem, size = 0x10000, scoped, tag = 'output window, operand 2, single buffered']
    #allocation18 [shape = 'u8[65536]{0}', space=vmem, size = 0x10000, scoped, tag = 'output window, operand 3, single buffered']
    #allocation19 [shape = 's32[1]{0}', space=sflag, size = 0x4, scoped, tag = 'scoped memory for tpu_custom_call.1']
    %16 = vsyncpa [#allocation3], 0
    %17 = vsyncpa [#allocation6], 0
    %18 = vsyncpa [#allocation9], 0
    %19 = vsyncpa [#allocation12], 0
    %20 = vsyncpa [#allocation4], 0
    %21 = vsyncpa [#allocation16], 0
    %22 = vsyncpa [#allocation19], 0
    // Predicated region
    $region2: #{tpu_custom_call.1} parent=1 // pred_check
      _
    $region3: #{tpu_custom_call.1} parent=1 // pred_check_branch
      %24 = sbr.rel (0) target = $region5
    $region4: #{tpu_custom_call.1} parent=1 // pred_region
      %26 = vsyncadd [#allocation3], 0
      %s27 = sshll.u32 %s0, 4
      %s28 = int_to_ptr.hbm [resolvable:$true] %s27
      %s29 = sshll.u32 [#allocation2], 4
      %s30 = int_to_ptr.vmem [resolvable:$true] %s29
      %35 = dma.hbm_to_vmem [thread:$0]  %s28, 1024, %s30, [#allocation3], 64, 64, 4
    $region5: #{tpu_custom_call.1} parent=1 // pred_fallthru
      _
    // Predicated region
    $region6: #{tpu_custom_call.1} parent=1 // pred_check
      _
    $region7: #{tpu_custom_call.1} parent=1 // pred_check_branch
      %37 = sbr.rel (0) target = $region9
    $region8: #{tpu_custom_call.1} parent=1 // pred_region
      %39 = vsyncadd [#allocation6], 0
      %s40 = sshll.u32 %s1, 4
      %s41 = int_to_ptr.hbm [resolvable:$true] %s40
      %s42 = sshll.u32 [#allocation5], 4
      %s43 = int_to_ptr.vmem [resolvable:$true] %s42
      %48 = dma.hbm_to_vmem [thread:$0]  %s41, 1024, %s43, [#allocation6], 64, 64, 4
    $region9: #{tpu_custom_call.1} parent=1 // pred_fallthru
      _
    // Predicated region
    $region10: #{tpu_custom_call.1} parent=1 // pred_check
      _
    $region11: #{tpu_custom_call.1} parent=1 // pred_check_branch
      %50 = sbr.rel (0) target = $region13
    $region12: #{tpu_custom_call.1} parent=1 // pred_region
      %52 = vsyncadd [#allocation6], 0
      %s53 = sshll.u32 %s2, 4
      %s54 = int_to_ptr.hbm [resolvable:$true] %s53
      %s55 = sshll.u32 [#allocation7], 4
      %s56 = int_to_ptr.vmem [resolvable:$true] %s55
      %61 = dma.hbm_to_vmem [thread:$0]  %s54, 1024, %s56, [#allocation6], 64, 64, 4
    $region13: #{tpu_custom_call.1} parent=1 // pred_fallthru
      _
    // Predicated region
    $region14: #{tpu_custom_call.1} parent=1 // pred_check
      _
    $region15: #{tpu_custom_call.1} parent=1 // pred_check_branch
      %63 = sbr.rel (0) target = $region17
    $region16: #{tpu_custom_call.1} parent=1 // pred_region
      %65 = vsyncadd [#allocation9], 0
      %s66 = sshll.u32 %s3, 4
      %s67 = int_to_ptr.hbm [resolvable:$true] %s66
      %s68 = sshll.u32 [#allocation8], 4
      %s69 = int_to_ptr.vmem [resolvable:$true] %s68
      %74 = dma.hbm_to_vmem [thread:$0]  %s67, 1024, %s69, [#allocation9], 64, 64, 4
    $region17: #{tpu_custom_call.1} parent=1 // pred_fallthru
      _
    // Predicated region
    $region18: #{tpu_custom_call.1} parent=1 // pred_check
      _
    $region19: #{tpu_custom_call.1} parent=1 // pred_check_branch
      %76 = sbr.rel (0) target = $region21
    $region20: #{tpu_custom_call.1} parent=1 // pred_region
      %78 = vsyncadd [#allocation9], 0
      %s79 = sshll.u32 %s4, 4
      %s80 = int_to_ptr.hbm [resolvable:$true] %s79
      %s81 = sshll.u32 [#allocation10], 4
      %s82 = int_to_ptr.vmem [resolvable:$true] %s81
      %87 = dma.hbm_to_vmem [thread:$0]  %s80, 1024, %s82, [#allocation9], 64, 64, 4
    $region21: #{tpu_custom_call.1} parent=1 // pred_fallthru
      _
    // Predicated region
    $region22: #{tpu_custom_call.1} parent=1 // pred_check
      _
    $region23: #{tpu_custom_call.1} parent=1 // pred_check_branch
      %89 = sbr.rel (0) target = $region25
    $region24: #{tpu_custom_call.1} parent=1 // pred_region
      %91 = vsyncadd [#allocation12], 0
      %s92 = sshll.u32 %s5, 4
      %s93 = int_to_ptr.hbm [resolvable:$true] %s92
      %s94 = sshll.u32 [#allocation11], 4
      %s95 = int_to_ptr.vmem [resolvable:$true] %s94
      %100 = dma.hbm_to_vmem [thread:$0]  %s93, 1024, %s95, [#allocation12], 64, 64, 4
    $region25: #{tpu_custom_call.1} parent=1 // pred_fallthru
      _
    // Predicated region
    $region26: #{tpu_custom_call.1} parent=1 // pred_check
      _
    $region27: #{tpu_custom_call.1} parent=1 // pred_check_branch
      %102 = sbr.rel (0) target = $region29
    $region28: #{tpu_custom_call.1} parent=1 // pred_region
      %104 = vsyncadd [#allocation12], 0
      %s105 = sshll.u32 %s6, 4
      %s106 = int_to_ptr.hbm [resolvable:$true] %s105
      %s107 = sshll.u32 [#allocation13], 4
      %s108 = int_to_ptr.vmem [resolvable:$true] %s107
      %113 = dma.hbm_to_vmem [thread:$0]  %s106, 1024, %s108, [#allocation12], 64, 64, 4
    $region29: #{tpu_custom_call.1} parent=1 // pred_fallthru
      _
    // Predicated region
    $region30: #{tpu_custom_call.1} parent=1 // pred_check
      _
    $region31: #{tpu_custom_call.1} parent=1 // pred_check_branch
      %115 = sbr.rel (0) target = $region33
    $region32: #{tpu_custom_call.1} parent=1 // pred_region
      %117 = dma.done [#allocation3], 1024
    $region33: #{tpu_custom_call.1} parent=1 // pred_fallthru
      _
    // Predicated region
    $region34: #{tpu_custom_call.1} parent=1 // pred_check
      _
    $region35: #{tpu_custom_call.1} parent=1 // pred_check_branch
      %119 = sbr.rel (0) target = $region37
    $region36: #{tpu_custom_call.1} parent=1 // pred_region
      %121 = dma.done [#allocation6], 1024
    $region37: #{tpu_custom_call.1} parent=1 // pred_fallthru
      _
    // Predicated region
    $region38: #{tpu_custom_call.1} parent=1 // pred_check
      _
    $region39: #{tpu_custom_call.1} parent=1 // pred_check_branch
      %123 = sbr.rel (0) target = $region41
    $region40: #{tpu_custom_call.1} parent=1 // pred_region
      %125 = dma.done [#allocation6], 1024
    $region41: #{tpu_custom_call.1} parent=1 // pred_fallthru
      _
    // Predicated region
    $region42: #{tpu_custom_call.1} parent=1 // pred_check
      _
    $region43: #{tpu_custom_call.1} parent=1 // pred_check_branch
      %127 = sbr.rel (0) target = $region45
    $region44: #{tpu_custom_call.1} parent=1 // pred_region
      %129 = dma.done [#allocation9], 1024
    $region45: #{tpu_custom_call.1} parent=1 // pred_fallthru
      _
    // Predicated region
    $region46: #{tpu_custom_call.1} parent=1 // pred_check
      _
    $region47: #{tpu_custom_call.1} parent=1 // pred_check_branch
      %131 = sbr.rel (0) target = $region49
    $region48: #{tpu_custom_call.1} parent=1 // pred_region
      %133 = dma.done [#allocation9], 1024
    $region49: #{tpu_custom_call.1} parent=1 // pred_fallthru
      _
    // Predicated region
    $region50: #{tpu_custom_call.1} parent=1 // pred_check
      _
    $region51: #{tpu_custom_call.1} parent=1 // pred_check_branch
      %135 = sbr.rel (0) target = $region53
    $region52: #{tpu_custom_call.1} parent=1 // pred_region
      %137 = dma.done [#allocation12], 1024
    $region53: #{tpu_custom_call.1} parent=1 // pred_fallthru
      _
    // Predicated region
    $region54: #{tpu_custom_call.1} parent=1 // pred_check
      _
    $region55: #{tpu_custom_call.1} parent=1 // pred_check_branch
      %139 = sbr.rel (0) target = $region57
    $region56: #{tpu_custom_call.1} parent=1 // pred_region
      %141 = dma.done [#allocation12], 1024
    $region57: #{tpu_custom_call.1} parent=1 // pred_fallthru
      _
    %v142 = vld [vmem:[#allocation5] sm:$0xf]
    %v143 = vld [vmem:[#allocation5 + $0x4] sm:$0xf]
    %v144 = vld [vmem:[#allocation5 + $0x8] sm:$0xf]
    %v145 = vld [vmem:[#allocation5 + $0xc] sm:$0xf]
    %v146 = vld [vmem:[#allocation5 + $0x10] sm:$0xf]
    %v147 = vld [vmem:[#allocation5 + $0x14] sm:$0xf]
    %v148 = vld [vmem:[#allocation5 + $0x18] sm:$0xf]
    %v149 = vld [vmem:[#allocation5 + $0x1c] sm:$0xf]
    %v150 = vld [vmem:[#allocation5 + $0x20] sm:$0xf]
    %v151 = vld [vmem:[#allocation5 + $0x24] sm:$0xf]
    %v152 = vld [vmem:[#allocation5 + $0x28] sm:$0xf]
    %v153 = vld [vmem:[#allocation5 + $0x2c] sm:$0xf]
    %v154 = vld [vmem:[#allocation5 + $0x30] sm:$0xf]
    %v155 = vld [vmem:[#allocation5 + $0x34] sm:$0xf]
    %v156 = vld [vmem:[#allocation5 + $0x38] sm:$0xf]
    %v157 = vld [vmem:[#allocation5 + $0x3c] sm:$0xf]
    %v158 = vld [vmem:[#allocation7] sm:$0xf]
    %v159 = vld [vmem:[#allocation7 + $0x4] sm:$0xf]
    %v160 = vld [vmem:[#allocation7 + $0x8] sm:$0xf]
    %v161 = vld [vmem:[#allocation7 + $0xc] sm:$0xf]
    %v162 = vld [vmem:[#allocation7 + $0x10] sm:$0xf]
    %v163 = vld [vmem:[#allocation7 + $0x14] sm:$0xf]
    %v164 = vld [vmem:[#allocation7 + $0x18] sm:$0xf]
    %v165 = vld [vmem:[#allocation7 + $0x1c] sm:$0xf]
    %v166 = vld [vmem:[#allocation7 + $0x20] sm:$0xf]
    %v167 = vld [vmem:[#allocation7 + $0x24] sm:$0xf]
    %v168 = vld [vmem:[#allocation7 + $0x28] sm:$0xf]
    %v169 = vld [vmem:[#allocation7 + $0x2c] sm:$0xf]
    %v170 = vld [vmem:[#allocation7 + $0x30] sm:$0xf]
    %v171 = vld [vmem:[#allocation7 + $0x34] sm:$0xf]
    %v172 = vld [vmem:[#allocation7 + $0x38] sm:$0xf]
    %v173 = vld [vmem:[#allocation7 + $0x3c] sm:$0xf]
    %v174 = vld [vmem:[#allocation2] sm:$0xf]
    %v175 = vld [vmem:[#allocation2 + $0x4] sm:$0xf]
    %v176 = vld [vmem:[#allocation2 + $0x8] sm:$0xf]
    %v177 = vld [vmem:[#allocation2 + $0xc] sm:$0xf]
    %v178 = vld [vmem:[#allocation2 + $0x10] sm:$0xf]
    %v179 = vld [vmem:[#allocation2 + $0x14] sm:$0xf]
    %v180 = vld [vmem:[#allocation2 + $0x18] sm:$0xf]
    %v181 = vld [vmem:[#allocation2 + $0x1c] sm:$0xf]
    %v182 = vld [vmem:[#allocation2 + $0x20] sm:$0xf]
    %v183 = vld [vmem:[#allocation2 + $0x24] sm:$0xf]
    %v184 = vld [vmem:[#allocation2 + $0x28] sm:$0xf]
    %v185 = vld [vmem:[#allocation2 + $0x2c] sm:$0xf]
    %v186 = vld [vmem:[#allocation2 + $0x30] sm:$0xf]
    %v187 = vld [vmem:[#allocation2 + $0x34] sm:$0xf]
    %v188 = vld [vmem:[#allocation2 + $0x38] sm:$0xf]
    %v189 = vld [vmem:[#allocation2 + $0x3c] sm:$0xf]
    %v190 = vld [vmem:[#allocation8] sm:$0xf]
    %v191 = vld [vmem:[#allocation8 + $0x4] sm:$0xf]
    %v192 = vld [vmem:[#allocation8 + $0x8] sm:$0xf]
    %v193 = vld [vmem:[#allocation8 + $0xc] sm:$0xf]
    %v194 = vld [vmem:[#allocation8 + $0x10] sm:$0xf]
    %v195 = vld [vmem:[#allocation8 + $0x14] sm:$0xf]
    %v196 = vld [vmem:[#allocation8 + $0x18] sm:$0xf]
    %v197 = vld [vmem:[#allocation8 + $0x1c] sm:$0xf]
    %v198 = vld [vmem:[#allocation8 + $0x20] sm:$0xf]
    %v199 = vld [vmem:[#allocation8 + $0x24] sm:$0xf]
    %v200 = vld [vmem:[#allocation8 + $0x28] sm:$0xf]
    %v201 = vld [vmem:[#allocation8 + $0x2c] sm:$0xf]
    %v202 = vld [vmem:[#allocation8 + $0x30] sm:$0xf]
    %v203 = vld [vmem:[#allocation8 + $0x34] sm:$0xf]
    %v204 = vld [vmem:[#allocation8 + $0x38] sm:$0xf]
    %v205 = vld [vmem:[#allocation8 + $0x3c] sm:$0xf]
    %v222 = vunpack.c.l.b16 %v174
    %v223 = vunpack.c.l.b16 %v175
    %v224 = vunpack.c.l.b16 %v176
    %v225 = vunpack.c.l.b16 %v177
    %v226 = vunpack.c.l.b16 %v178
    %v227 = vunpack.c.l.b16 %v179
    %v228 = vunpack.c.l.b16 %v180
    %v229 = vunpack.c.l.b16 %v181
    %v230 = vunpack.c.l.b16 %v182
    %v231 = vunpack.c.l.b16 %v183
    %v232 = vunpack.c.l.b16 %v184
    %v233 = vunpack.c.l.b16 %v185
    %v234 = vunpack.c.l.b16 %v186
    %v235 = vunpack.c.l.b16 %v187
    %v236 = vunpack.c.l.b16 %v188
    %v237 = vunpack.c.l.b16 %v189
    %v238 = vpack.c.b16 %v223, %v222
    %v239 = vpack.c.b16 %v225, %v224
    %v240 = vpack.c.b16 %v227, %v226
    %v241 = vpack.c.b16 %v229, %v228
    %v242 = vpack.c.b16 %v231, %v230
    %v243 = vpack.c.b16 %v233, %v232
    %v244 = vpack.c.b16 %v235, %v234
    %v245 = vpack.c.b16 %v237, %v236
    %v270 = vunpack.c.l.b16 %v190
    %v271 = vunpack.c.l.b16 %v191
    %v272 = vunpack.c.l.b16 %v192
    %v273 = vunpack.c.l.b16 %v193
    %v274 = vunpack.c.l.b16 %v194
    %v275 = vunpack.c.l.b16 %v195
    %v276 = vunpack.c.l.b16 %v196
    %v277 = vunpack.c.l.b16 %v197
    %v278 = vunpack.c.l.b16 %v198
    %v279 = vunpack.c.l.b16 %v199
    %v280 = vunpack.c.l.b16 %v200
    %v281 = vunpack.c.l.b16 %v201
    %v282 = vunpack.c.l.b16 %v202
    %v283 = vunpack.c.l.b16 %v203
    %v284 = vunpack.c.l.b16 %v204
    %v285 = vunpack.c.l.b16 %v205
    %v286 = vpack.c.b16 %v271, %v270
    %v287 = vpack.c.b16 %v273, %v272
    %v288 = vpack.c.b16 %v275, %v274
    %v289 = vpack.c.b16 %v277, %v276
    %v290 = vpack.c.b16 %v279, %v278
    %v291 = vpack.c.b16 %v281, %v280
    %v292 = vpack.c.b16 %v283, %v282
    %v293 = vpack.c.b16 %v285, %v284
    %302 = vmatpush.bf16.msra.mxu0 %v293
    %303 = vmatpush.bf16.msra.mxu0 %v292
    %304 = vmatpush.bf16.msra.mxu0 %v291
    %305 = vmatpush.bf16.msra.mxu0 %v290
    %306 = vmatpush.bf16.msra.mxu0 %v289
    %307 = vmatpush.bf16.msra.mxu0 %v288
    %308 = vmatpush.bf16.msra.mxu0 %v287
    %309 = vmatpush.bf16.msra.mxu0 %v286
    %310 = vmatmul.bf16.gmra.mxu0 %v238
    %v311 = vpop.f32.mrf.mxu0
    %v312 = vadd.f32 0.0, %v311
    %v313 = vpop.f32.mrf.mxu0
    %v314 = vadd.f32 0.0, %v313
    %315 = vmatmul.bf16.gmra.mxu0 %v239
    %v316 = vpop.f32.mrf.mxu0
    %v317 = vadd.f32 0.0, %v316
    %v318 = vpop.f32.mrf.mxu0
    %v319 = vadd.f32 0.0, %v318
    %320 = vmatmul.bf16.gmra.mxu0 %v240
    %v321 = vpop.f32.mrf.mxu0
    %v322 = vadd.f32 0.0, %v321
    %v323 = vpop.f32.mrf.mxu0
    %v324 = vadd.f32 0.0, %v323
    %325 = vmatmul.bf16.gmra.mxu0 %v241
    %v326 = vpop.f32.mrf.mxu0
    %v327 = vadd.f32 0.0, %v326
    %v328 = vpop.f32.mrf.mxu0
    %v329 = vadd.f32 0.0, %v328
    %330 = vmatmul.bf16.gmra.mxu0 %v242
    %v331 = vpop.f32.mrf.mxu0
    %v332 = vadd.f32 0.0, %v331
    %v333 = vpop.f32.mrf.mxu0
    %v334 = vadd.f32 0.0, %v333
    %335 = vmatmul.bf16.gmra.mxu0 %v243
    %v336 = vpop.f32.mrf.mxu0
    %v337 = vadd.f32 0.0, %v336
    %v338 = vpop.f32.mrf.mxu0
    %v339 = vadd.f32 0.0, %v338
    %340 = vmatmul.bf16.gmra.mxu0 %v244
    %v341 = vpop.f32.mrf.mxu0
    %v342 = vadd.f32 0.0, %v341
    %v343 = vpop.f32.mrf.mxu0
    %v344 = vadd.f32 0.0, %v343
    %345 = vmatmul.bf16.gmra.mxu0 %v245
    %v346 = vpop.f32.mrf.mxu0
    %v347 = vadd.f32 0.0, %v346
    %v348 = vpop.f32.mrf.mxu0
    %v349 = vadd.f32 0.0, %v348
    %350 = vdwg.mxu0
    %v351 = vpack.c.bf16 %v314, %v312
    %v352 = vpack.c.bf16 %v319, %v317
    %v353 = vpack.c.bf16 %v324, %v322
    %v354 = vpack.c.bf16 %v329, %v327
    %v355 = vpack.c.bf16 %v334, %v332
    %v356 = vpack.c.bf16 %v339, %v337
    %v357 = vpack.c.bf16 %v344, %v342
    %v358 = vpack.c.bf16 %v349, %v347
    %v375 = vunpack.c.l.b16 %v142
    %v376 = vunpack.c.l.b16 %v143
    %v377 = vunpack.c.l.b16 %v144
    %v378 = vunpack.c.l.b16 %v145
    %v379 = vunpack.c.l.b16 %v146
    %v380 = vunpack.c.l.b16 %v147
    %v381 = vunpack.c.l.b16 %v148
    %v382 = vunpack.c.l.b16 %v149
    %v383 = vunpack.c.l.b16 %v150
    %v384 = vunpack.c.l.b16 %v151
    %v385 = vunpack.c.l.b16 %v152
    %v386 = vunpack.c.l.b16 %v153
    %v387 = vunpack.c.l.b16 %v154
    %v388 = vunpack.c.l.b16 %v155
    %v389 = vunpack.c.l.b16 %v156
    %v390 = vunpack.c.l.b16 %v157
    %v391 = vpack.c.b16 %v376, %v375
    %v392 = vpack.c.b16 %v378, %v377
    %v393 = vpack.c.b16 %v380, %v379
    %v394 = vpack.c.b16 %v382, %v381
    %v395 = vpack.c.b16 %v384, %v383
    %v396 = vpack.c.b16 %v386, %v385
    %v397 = vpack.c.b16 %v388, %v387
    %v398 = vpack.c.b16 %v390, %v389
    %407 = vmatpush.bf16.msra.mxu0 %v358
    %408 = vmatpush.bf16.msra.mxu0 %v357
    %409 = vmatpush.bf16.msra.mxu0 %v356
    %410 = vmatpush.bf16.msra.mxu0 %v355
    %411 = vmatpush.bf16.msra.mxu0 %v354
    %412 = vmatpush.bf16.msra.mxu0 %v353
    %413 = vmatpush.bf16.msra.mxu0 %v352
    %414 = vmatpush.bf16.msra.mxu0 %v351
    %415 = vmatmul.bf16.gmra.mxu0 %v391
    %v416 = vpop.f32.mrf.mxu0
    %v417 = vadd.f32 0.0, %v416
    %v418 = vpop.f32.mrf.mxu0
    %v419 = vadd.f32 0.0, %v418
    %420 = vmatmul.bf16.gmra.mxu0 %v392
    %v421 = vpop.f32.mrf.mxu0
    %v422 = vadd.f32 0.0, %v421
    %v423 = vpop.f32.mrf.mxu0
    %v424 = vadd.f32 0.0, %v423
    %425 = vmatmul.bf16.gmra.mxu0 %v393
    %v426 = vpop.f32.mrf.mxu0
    %v427 = vadd.f32 0.0, %v426
    %v428 = vpop.f32.mrf.mxu0
    %v429 = vadd.f32 0.0, %v428
    %430 = vmatmul.bf16.gmra.mxu0 %v394
    %v431 = vpop.f32.mrf.mxu0
    %v432 = vadd.f32 0.0, %v431
    %v433 = vpop.f32.mrf.mxu0
    %v434 = vadd.f32 0.0, %v433
    %435 = vmatmul.bf16.gmra.mxu0 %v395
    %v436 = vpop.f32.mrf.mxu0
    %v437 = vadd.f32 0.0, %v436
    %v438 = vpop.f32.mrf.mxu0
    %v439 = vadd.f32 0.0, %v438
    %440 = vmatmul.bf16.gmra.mxu0 %v396
    %v441 = vpop.f32.mrf.mxu0
    %v442 = vadd.f32 0.0, %v441
    %v443 = vpop.f32.mrf.mxu0
    %v444 = vadd.f32 0.0, %v443
    %445 = vmatmul.bf16.gmra.mxu0 %v397
    %v446 = vpop.f32.mrf.mxu0
    %v447 = vadd.f32 0.0, %v446
    %v448 = vpop.f32.mrf.mxu0
    %v449 = vadd.f32 0.0, %v448
    %450 = vmatmul.bf16.gmra.mxu0 %v398
    %v451 = vpop.f32.mrf.mxu0
    %v452 = vadd.f32 0.0, %v451
    %v453 = vpop.f32.mrf.mxu0
    %v454 = vadd.f32 0.0, %v453
    %455 = vdwg.mxu0
    %vm456 = vcmp.gt.f32.partialorder %v417, 0.0
    %vm457 = vcmp.gt.f32.partialorder %v419, 0.0
    %vm458 = vcmp.gt.f32.partialorder %v422, 0.0
    %vm459 = vcmp.gt.f32.partialorder %v424, 0.0
    %vm460 = vcmp.gt.f32.partialorder %v427, 0.0
    %vm461 = vcmp.gt.f32.partialorder %v429, 0.0
    %vm462 = vcmp.gt.f32.partialorder %v432, 0.0
    %vm463 = vcmp.gt.f32.partialorder %v434, 0.0
    %vm464 = vcmp.gt.f32.partialorder %v437, 0.0
    %vm465 = vcmp.gt.f32.partialorder %v439, 0.0
    %vm466 = vcmp.gt.f32.partialorder %v442, 0.0
    %vm467 = vcmp.gt.f32.partialorder %v444, 0.0
    %vm468 = vcmp.gt.f32.partialorder %v447, 0.0
    %vm469 = vcmp.gt.f32.partialorder %v449, 0.0
    %vm470 = vcmp.gt.f32.partialorder %v452, 0.0
    %vm471 = vcmp.gt.f32.partialorder %v454, 0.0
    %v472 = vmul.f32 %v417, 0.2
    %v473 = vmul.f32 %v419, 0.2
    %v474 = vmul.f32 %v422, 0.2
    %v475 = vmul.f32 %v424, 0.2
    %v476 = vmul.f32 %v427, 0.2
    %v477 = vmul.f32 %v429, 0.2
    %v478 = vmul.f32 %v432, 0.2
    %v479 = vmul.f32 %v434, 0.2
    %v480 = vmul.f32 %v437, 0.2
    %v481 = vmul.f32 %v439, 0.2
    %v482 = vmul.f32 %v442, 0.2
    %v483 = vmul.f32 %v444, 0.2
    %v484 = vmul.f32 %v447, 0.2
    %v485 = vmul.f32 %v449, 0.2
    %v486 = vmul.f32 %v452, 0.2
    %v487 = vmul.f32 %v454, 0.2
    %v488 = vsel %vm456, %v417, %v472
    %v489 = vsel %vm457, %v419, %v473
    %v490 = vsel %vm458, %v422, %v474
    %v491 = vsel %vm459, %v424, %v475
    %v492 = vsel %vm460, %v427, %v476
    %v493 = vsel %vm461, %v429, %v477
    %v494 = vsel %vm462, %v432, %v478
    %v495 = vsel %vm463, %v434, %v479
    %v496 = vsel %vm464, %v437, %v480
    %v497 = vsel %vm465, %v439, %v481
    %v498 = vsel %vm466, %v442, %v482
    %v499 = vsel %vm467, %v444, %v483
    %v500 = vsel %vm468, %v447, %v484
    %v501 = vsel %vm469, %v449, %v485
    %v502 = vsel %vm470, %v452, %v486
    %v503 = vsel %vm471, %v454, %v487
    %504 = vst [vmem:[#allocation14] sm:$0xff] %v488
    %505 = vst [vmem:[#allocation14 + $0x8] sm:$0xff] %v489
    %506 = vst [vmem:[#allocation14 + $0x10] sm:$0xff] %v490
    %507 = vst [vmem:[#allocation14 + $0x18] sm:$0xff] %v491
    %508 = vst [vmem:[#allocation14 + $0x20] sm:$0xff] %v492
    %509 = vst [vmem:[#allocation14 + $0x28] sm:$0xff] %v493
    %510 = vst [vmem:[#allocation14 + $0x30] sm:$0xff] %v494
    %511 = vst [vmem:[#allocation14 + $0x38] sm:$0xff] %v495
    %512 = vst [vmem:[#allocation14 + $0x40] sm:$0xff] %v496
    %513 = vst [vmem:[#allocation14 + $0x48] sm:$0xff] %v497
    %514 = vst [vmem:[#allocation14 + $0x50] sm:$0xff] %v498
    %515 = vst [vmem:[#allocation14 + $0x58] sm:$0xff] %v499
    %516 = vst [vmem:[#allocation14 + $0x60] sm:$0xff] %v500
    %517 = vst [vmem:[#allocation14 + $0x68] sm:$0xff] %v501
    %518 = vst [vmem:[#allocation14 + $0x70] sm:$0xff] %v502
    %519 = vst [vmem:[#allocation14 + $0x78] sm:$0xff] %v503
    %v520 = vpack.c.bf16 %v489, %v488
    %v521 = vpack.c.bf16 %v491, %v490
    %v522 = vpack.c.bf16 %v493, %v492
    %v523 = vpack.c.bf16 %v495, %v494
    %v524 = vpack.c.bf16 %v497, %v496
    %v525 = vpack.c.bf16 %v499, %v498
    %v526 = vpack.c.bf16 %v501, %v500
    %v527 = vpack.c.bf16 %v503, %v502
    %v528 = vld [vmem:[#allocation10] sm:$0xf]
    %v529 = vld [vmem:[#allocation10 + $0x4] sm:$0xf]
    %v530 = vld [vmem:[#allocation10 + $0x8] sm:$0xf]
    %v531 = vld [vmem:[#allocation10 + $0xc] sm:$0xf]
    %v532 = vld [vmem:[#allocation10 + $0x10] sm:$0xf]
    %v533 = vld [vmem:[#allocation10 + $0x14] sm:$0xf]
    %v534 = vld [vmem:[#allocation10 + $0x18] sm:$0xf]
    %v535 = vld [vmem:[#allocation10 + $0x1c] sm:$0xf]
    %v536 = vld [vmem:[#allocation10 + $0x20] sm:$0xf]
    %v537 = vld [vmem:[#allocation10 + $0x24] sm:$0xf]
    %v538 = vld [vmem:[#allocation10 + $0x28] sm:$0xf]
    %v539 = vld [vmem:[#allocation10 + $0x2c] sm:$0xf]
    %v540 = vld [vmem:[#allocation10 + $0x30] sm:$0xf]
    %v541 = vld [vmem:[#allocation10 + $0x34] sm:$0xf]
    %v542 = vld [vmem:[#allocation10 + $0x38] sm:$0xf]
    %v543 = vld [vmem:[#allocation10 + $0x3c] sm:$0xf]
    %v560 = vunpack.c.l.b16 %v528
    %v561 = vunpack.c.l.b16 %v529
    %v562 = vunpack.c.l.b16 %v530
    %v563 = vunpack.c.l.b16 %v531
    %v564 = vunpack.c.l.b16 %v532
    %v565 = vunpack.c.l.b16 %v533
    %v566 = vunpack.c.l.b16 %v534
    %v567 = vunpack.c.l.b16 %v535
    %v568 = vunpack.c.l.b16 %v536
    %v569 = vunpack.c.l.b16 %v537
    %v570 = vunpack.c.l.b16 %v538
    %v571 = vunpack.c.l.b16 %v539
    %v572 = vunpack.c.l.b16 %v540
    %v573 = vunpack.c.l.b16 %v541
    %v574 = vunpack.c.l.b16 %v542
    %v575 = vunpack.c.l.b16 %v543
    %v576 = vpack.c.b16 %v561, %v560
    %v577 = vpack.c.b16 %v563, %v562
    %v578 = vpack.c.b16 %v565, %v564
    %v579 = vpack.c.b16 %v567, %v566
    %v580 = vpack.c.b16 %v569, %v568
    %v581 = vpack.c.b16 %v571, %v570
    %v582 = vpack.c.b16 %v573, %v572
    %v583 = vpack.c.b16 %v575, %v574
    %592 = vmatpush.bf16.msra.mxu0 %v583
    %593 = vmatpush.bf16.msra.mxu0 %v582
    %594 = vmatpush.bf16.msra.mxu0 %v581
    %595 = vmatpush.bf16.msra.mxu0 %v580
    %596 = vmatpush.bf16.msra.mxu0 %v579
    %597 = vmatpush.bf16.msra.mxu0 %v578
    %598 = vmatpush.bf16.msra.mxu0 %v577
    %599 = vmatpush.bf16.msra.mxu0 %v576
    %600 = vmatmul.bf16.gmra.mxu0 %v520
    %v601 = vpop.f32.mrf.mxu0
    %v602 = vadd.f32 0.0, %v601
    %v603 = vpop.f32.mrf.mxu0
    %v604 = vadd.f32 0.0, %v603
    %605 = vmatmul.bf16.gmra.mxu0 %v521
    %v606 = vpop.f32.mrf.mxu0
    %v607 = vadd.f32 0.0, %v606
    %v608 = vpop.f32.mrf.mxu0
    %v609 = vadd.f32 0.0, %v608
    %610 = vmatmul.bf16.gmra.mxu0 %v522
    %v611 = vpop.f32.mrf.mxu0
    %v612 = vadd.f32 0.0, %v611
    %v613 = vpop.f32.mrf.mxu0
    %v614 = vadd.f32 0.0, %v613
    %615 = vmatmul.bf16.gmra.mxu0 %v523
    %v616 = vpop.f32.mrf.mxu0
    %v617 = vadd.f32 0.0, %v616
    %v618 = vpop.f32.mrf.mxu0
    %v619 = vadd.f32 0.0, %v618
    %620 = vmatmul.bf16.gmra.mxu0 %v524
    %v621 = vpop.f32.mrf.mxu0
    %v622 = vadd.f32 0.0, %v621
    %v623 = vpop.f32.mrf.mxu0
    %v624 = vadd.f32 0.0, %v623
    %625 = vmatmul.bf16.gmra.mxu0 %v525
    %v626 = vpop.f32.mrf.mxu0
    %v627 = vadd.f32 0.0, %v626
    %v628 = vpop.f32.mrf.mxu0
    %v629 = vadd.f32 0.0, %v628
    %630 = vmatmul.bf16.gmra.mxu0 %v526
    %v631 = vpop.f32.mrf.mxu0
    %v632 = vadd.f32 0.0, %v631
    %v633 = vpop.f32.mrf.mxu0
    %v634 = vadd.f32 0.0, %v633
    %635 = vmatmul.bf16.gmra.mxu0 %v527
    %v636 = vpop.f32.mrf.mxu0
    %v637 = vadd.f32 0.0, %v636
    %v638 = vpop.f32.mrf.mxu0
    %v639 = vadd.f32 0.0, %v638
    %640 = vdwg.mxu0
    %v641 = vpack.c.bf16 %v604, %v602
    %v642 = vpack.c.bf16 %v609, %v607
    %v643 = vpack.c.bf16 %v614, %v612
    %v644 = vpack.c.bf16 %v619, %v617
    %v645 = vpack.c.bf16 %v624, %v622
    %v646 = vpack.c.bf16 %v629, %v627
    %v647 = vpack.c.bf16 %v634, %v632
    %v648 = vpack.c.bf16 %v639, %v637
    %649 = vmatpush.bf16.msra.mxu0 %v648
    %650 = vmatpush.bf16.msra.mxu0 %v647
    %651 = vmatpush.bf16.msra.mxu0 %v646
    %652 = vmatpush.bf16.msra.mxu0 %v645
    %653 = vmatpush.bf16.msra.mxu0 %v644
    %654 = vmatpush.bf16.msra.mxu0 %v643
    %655 = vmatpush.bf16.msra.mxu0 %v642
    %656 = vmatpush.bf16.msra.mxu0 %v641
    %657 = vmatmul.bf16.gmra.mxu0 %v391
    %v658 = vpop.f32.mrf.mxu0
    %v659 = vadd.f32 0.0, %v658
    %v660 = vpop.f32.mrf.mxu0
    %v661 = vadd.f32 0.0, %v660
    %662 = vmatmul.bf16.gmra.mxu0 %v392
    %v663 = vpop.f32.mrf.mxu0
    %v664 = vadd.f32 0.0, %v663
    %v665 = vpop.f32.mrf.mxu0
    %v666 = vadd.f32 0.0, %v665
    %667 = vmatmul.bf16.gmra.mxu0 %v393
    %v668 = vpop.f32.mrf.mxu0
    %v669 = vadd.f32 0.0, %v668
    %v670 = vpop.f32.mrf.mxu0
    %v671 = vadd.f32 0.0, %v670
    %672 = vmatmul.bf16.gmra.mxu0 %v394
    %v673 = vpop.f32.mrf.mxu0
    %v674 = vadd.f32 0.0, %v673
    %v675 = vpop.f32.mrf.mxu0
    %v676 = vadd.f32 0.0, %v675
    %677 = vmatmul.bf16.gmra.mxu0 %v395
    %v678 = vpop.f32.mrf.mxu0
    %v679 = vadd.f32 0.0, %v678
    %v680 = vpop.f32.mrf.mxu0
    %v681 = vadd.f32 0.0, %v680
    %682 = vmatmul.bf16.gmra.mxu0 %v396
    %v683 = vpop.f32.mrf.mxu0
    %v684 = vadd.f32 0.0, %v683
    %v685 = vpop.f32.mrf.mxu0
    %v686 = vadd.f32 0.0, %v685
    %687 = vmatmul.bf16.gmra.mxu0 %v397
    %v688 = vpop.f32.mrf.mxu0
    %v689 = vadd.f32 0.0, %v688
    %v690 = vpop.f32.mrf.mxu0
    %v691 = vadd.f32 0.0, %v690
    %692 = vmatmul.bf16.gmra.mxu0 %v398
    %v693 = vpop.f32.mrf.mxu0
    %v694 = vadd.f32 0.0, %v693
    %v695 = vpop.f32.mrf.mxu0
    %v696 = vadd.f32 0.0, %v695
    %697 = vdwg.mxu0
    %698 = vst [vmem:[#allocation15] sm:$0xff] %v659
    %699 = vst [vmem:[#allocation15 + $0x8] sm:$0xff] %v661
    %700 = vst [vmem:[#allocation15 + $0x10] sm:$0xff] %v664
    %701 = vst [vmem:[#allocation15 + $0x18] sm:$0xff] %v666
    %702 = vst [vmem:[#allocation15 + $0x20] sm:$0xff] %v669
    %703 = vst [vmem:[#allocation15 + $0x28] sm:$0xff] %v671
    %704 = vst [vmem:[#allocation15 + $0x30] sm:$0xff] %v674
    %705 = vst [vmem:[#allocation15 + $0x38] sm:$0xff] %v676
    %706 = vst [vmem:[#allocation15 + $0x40] sm:$0xff] %v679
    %707 = vst [vmem:[#allocation15 + $0x48] sm:$0xff] %v681
    %708 = vst [vmem:[#allocation15 + $0x50] sm:$0xff] %v684
    %709 = vst [vmem:[#allocation15 + $0x58] sm:$0xff] %v686
    %710 = vst [vmem:[#allocation15 + $0x60] sm:$0xff] %v689
    %711 = vst [vmem:[#allocation15 + $0x68] sm:$0xff] %v691
    %712 = vst [vmem:[#allocation15 + $0x70] sm:$0xff] %v694
    %713 = vst [vmem:[#allocation15 + $0x78] sm:$0xff] %v696
    %v714 = vpack.c.bf16 %v661, %v659
    %v715 = vpack.c.bf16 %v666, %v664
    %v716 = vpack.c.bf16 %v671, %v669
    %v717 = vpack.c.bf16 %v676, %v674
    %v718 = vpack.c.bf16 %v681, %v679
    %v719 = vpack.c.bf16 %v686, %v684
    %v720 = vpack.c.bf16 %v691, %v689
    %v721 = vpack.c.bf16 %v696, %v694
    %v722 = vld [vmem:[#allocation11] sm:$0xf]
    %v723 = vld [vmem:[#allocation11 + $0x4] sm:$0xf]
    %v724 = vld [vmem:[#allocation11 + $0x8] sm:$0xf]
    %v725 = vld [vmem:[#allocation11 + $0xc] sm:$0xf]
    %v726 = vld [vmem:[#allocation11 + $0x10] sm:$0xf]
    %v727 = vld [vmem:[#allocation11 + $0x14] sm:$0xf]
    %v728 = vld [vmem:[#allocation11 + $0x18] sm:$0xf]
    %v729 = vld [vmem:[#allocation11 + $0x1c] sm:$0xf]
    %v730 = vld [vmem:[#allocation11 + $0x20] sm:$0xf]
    %v731 = vld [vmem:[#allocation11 + $0x24] sm:$0xf]
    %v732 = vld [vmem:[#allocation11 + $0x28] sm:$0xf]
    %v733 = vld [vmem:[#allocation11 + $0x2c] sm:$0xf]
    %v734 = vld [vmem:[#allocation11 + $0x30] sm:$0xf]
    %v735 = vld [vmem:[#allocation11 + $0x34] sm:$0xf]
    %v736 = vld [vmem:[#allocation11 + $0x38] sm:$0xf]
    %v737 = vld [vmem:[#allocation11 + $0x3c] sm:$0xf]
    %v754 = vunpack.c.l.b16 %v722
    %v755 = vunpack.c.l.b16 %v723
    %v756 = vunpack.c.l.b16 %v724
    %v757 = vunpack.c.l.b16 %v725
    %v758 = vunpack.c.l.b16 %v726
    %v759 = vunpack.c.l.b16 %v727
    %v760 = vunpack.c.l.b16 %v728
    %v761 = vunpack.c.l.b16 %v729
    %v762 = vunpack.c.l.b16 %v730
    %v763 = vunpack.c.l.b16 %v731
    %v764 = vunpack.c.l.b16 %v732
    %v765 = vunpack.c.l.b16 %v733
    %v766 = vunpack.c.l.b16 %v734
    %v767 = vunpack.c.l.b16 %v735
    %v768 = vunpack.c.l.b16 %v736
    %v769 = vunpack.c.l.b16 %v737
    %v770 = vpack.c.b16 %v755, %v754
    %v771 = vpack.c.b16 %v757, %v756
    %v772 = vpack.c.b16 %v759, %v758
    %v773 = vpack.c.b16 %v761, %v760
    %v774 = vpack.c.b16 %v763, %v762
    %v775 = vpack.c.b16 %v765, %v764
    %v776 = vpack.c.b16 %v767, %v766
    %v777 = vpack.c.b16 %v769, %v768
    %786 = vmatpush.bf16.msra.mxu0 %v777
    %787 = vmatpush.bf16.msra.mxu0 %v776
    %788 = vmatpush.bf16.msra.mxu0 %v775
    %789 = vmatpush.bf16.msra.mxu0 %v774
    %790 = vmatpush.bf16.msra.mxu0 %v773
    %791 = vmatpush.bf16.msra.mxu0 %v772
    %792 = vmatpush.bf16.msra.mxu0 %v771
    %793 = vmatpush.bf16.msra.mxu0 %v770
    %794 = vmatmul.bf16.gmra.mxu0 %v714
    %v795 = vpop.f32.mrf.mxu0
    %v796 = vadd.f32 0.0, %v795
    %v797 = vpop.f32.mrf.mxu0
    %v798 = vadd.f32 0.0, %v797
    %799 = vmatmul.bf16.gmra.mxu0 %v715
    %v800 = vpop.f32.mrf.mxu0
    %v801 = vadd.f32 0.0, %v800
    %v802 = vpop.f32.mrf.mxu0
    %v803 = vadd.f32 0.0, %v802
    %804 = vmatmul.bf16.gmra.mxu0 %v716
    %v805 = vpop.f32.mrf.mxu0
    %v806 = vadd.f32 0.0, %v805
    %v807 = vpop.f32.mrf.mxu0
    %v808 = vadd.f32 0.0, %v807
    %809 = vmatmul.bf16.gmra.mxu0 %v717
    %v810 = vpop.f32.mrf.mxu0
    %v811 = vadd.f32 0.0, %v810
    %v812 = vpop.f32.mrf.mxu0
    %v813 = vadd.f32 0.0, %v812
    %814 = vmatmul.bf16.gmra.mxu0 %v718
    %v815 = vpop.f32.mrf.mxu0
    %v816 = vadd.f32 0.0, %v815
    %v817 = vpop.f32.mrf.mxu0
    %v818 = vadd.f32 0.0, %v817
    %819 = vmatmul.bf16.gmra.mxu0 %v719
    %v820 = vpop.f32.mrf.mxu0
    %v821 = vadd.f32 0.0, %v820
    %v822 = vpop.f32.mrf.mxu0
    %v823 = vadd.f32 0.0, %v822
    %824 = vmatmul.bf16.gmra.mxu0 %v720
    %v825 = vpop.f32.mrf.mxu0
    %v826 = vadd.f32 0.0, %v825
    %v827 = vpop.f32.mrf.mxu0
    %v828 = vadd.f32 0.0, %v827
    %829 = vmatmul.bf16.gmra.mxu0 %v721
    %v830 = vpop.f32.mrf.mxu0
    %v831 = vadd.f32 0.0, %v830
    %v832 = vpop.f32.mrf.mxu0
    %v833 = vadd.f32 0.0, %v832
    %834 = vdwg.mxu0
    %v835 = vpack.c.bf16 %v798, %v796
    %v836 = vpack.c.bf16 %v803, %v801
    %v837 = vpack.c.bf16 %v808, %v806
    %v838 = vpack.c.bf16 %v813, %v811
    %v839 = vpack.c.bf16 %v818, %v816
    %v840 = vpack.c.bf16 %v823, %v821
    %v841 = vpack.c.bf16 %v828, %v826
    %v842 = vpack.c.bf16 %v833, %v831
    %v859 = vunpack.c.l.b16 %v158
    %v860 = vunpack.c.l.b16 %v159
    %v861 = vunpack.c.l.b16 %v160
    %v862 = vunpack.c.l.b16 %v161
    %v863 = vunpack.c.l.b16 %v162
    %v864 = vunpack.c.l.b16 %v163
    %v865 = vunpack.c.l.b16 %v164
    %v866 = vunpack.c.l.b16 %v165
    %v867 = vunpack.c.l.b16 %v166
    %v868 = vunpack.c.l.b16 %v167
    %v869 = vunpack.c.l.b16 %v168
    %v870 = vunpack.c.l.b16 %v169
    %v871 = vunpack.c.l.b16 %v170
    %v872 = vunpack.c.l.b16 %v171
    %v873 = vunpack.c.l.b16 %v172
    %v874 = vunpack.c.l.b16 %v173
    %v875 = vpack.c.b16 %v860, %v859
    %v876 = vpack.c.b16 %v862, %v861
    %v877 = vpack.c.b16 %v864, %v863
    %v878 = vpack.c.b16 %v866, %v865
    %v879 = vpack.c.b16 %v868, %v867
    %v880 = vpack.c.b16 %v870, %v869
    %v881 = vpack.c.b16 %v872, %v871
    %v882 = vpack.c.b16 %v874, %v873
    %891 = vmatpush.bf16.msra.mxu0 %v842
    %892 = vmatpush.bf16.msra.mxu0 %v841
    %893 = vmatpush.bf16.msra.mxu0 %v840
    %894 = vmatpush.bf16.msra.mxu0 %v839
    %895 = vmatpush.bf16.msra.mxu0 %v838
    %896 = vmatpush.bf16.msra.mxu0 %v837
    %897 = vmatpush.bf16.msra.mxu0 %v836
    %898 = vmatpush.bf16.msra.mxu0 %v835
    %899 = vmatmul.bf16.gmra.mxu0 %v875
    %v900 = vpop.f32.mrf.mxu0
    %v901 = vadd.f32 0.0, %v900
    %v902 = vpop.f32.mrf.mxu0
    %v903 = vadd.f32 0.0, %v902
    %904 = vmatmul.bf16.gmra.mxu0 %v876
    %v905 = vpop.f32.mrf.mxu0
    %v906 = vadd.f32 0.0, %v905
    %v907 = vpop.f32.mrf.mxu0
    %v908 = vadd.f32 0.0, %v907
    %909 = vmatmul.bf16.gmra.mxu0 %v877
    %v910 = vpop.f32.mrf.mxu0
    %v911 = vadd.f32 0.0, %v910
    %v912 = vpop.f32.mrf.mxu0
    %v913 = vadd.f32 0.0, %v912
    %914 = vmatmul.bf16.gmra.mxu0 %v878
    %v915 = vpop.f32.mrf.mxu0
    %v916 = vadd.f32 0.0, %v915
    %v917 = vpop.f32.mrf.mxu0
    %v918 = vadd.f32 0.0, %v917
    %919 = vmatmul.bf16.gmra.mxu0 %v879
    %v920 = vpop.f32.mrf.mxu0
    %v921 = vadd.f32 0.0, %v920
    %v922 = vpop.f32.mrf.mxu0
    %v923 = vadd.f32 0.0, %v922
    %924 = vmatmul.bf16.gmra.mxu0 %v880
    %v925 = vpop.f32.mrf.mxu0
    %v926 = vadd.f32 0.0, %v925
    %v927 = vpop.f32.mrf.mxu0
    %v928 = vadd.f32 0.0, %v927
    %929 = vmatmul.bf16.gmra.mxu0 %v881
    %v930 = vpop.f32.mrf.mxu0
    %v931 = vadd.f32 0.0, %v930
    %v932 = vpop.f32.mrf.mxu0
    %v933 = vadd.f32 0.0, %v932
    %934 = vmatmul.bf16.gmra.mxu0 %v882
    %v935 = vpop.f32.mrf.mxu0
    %v936 = vadd.f32 0.0, %v935
    %v937 = vpop.f32.mrf.mxu0
    %v938 = vadd.f32 0.0, %v937
    %939 = vdwg.mxu0
    %940 = vst [vmem:[#allocation17] sm:$0xff] %v901
    %941 = vst [vmem:[#allocation17 + $0x8] sm:$0xff] %v903
    %942 = vst [vmem:[#allocation17 + $0x10] sm:$0xff] %v906
    %943 = vst [vmem:[#allocation17 + $0x18] sm:$0xff] %v908
    %944 = vst [vmem:[#allocation17 + $0x20] sm:$0xff] %v911
    %945 = vst [vmem:[#allocation17 + $0x28] sm:$0xff] %v913
    %946 = vst [vmem:[#allocation17 + $0x30] sm:$0xff] %v916
    %947 = vst [vmem:[#allocation17 + $0x38] sm:$0xff] %v918
    %948 = vst [vmem:[#allocation17 + $0x40] sm:$0xff] %v921
    %949 = vst [vmem:[#allocation17 + $0x48] sm:$0xff] %v923
    %950 = vst [vmem:[#allocation17 + $0x50] sm:$0xff] %v926
    %951 = vst [vmem:[#allocation17 + $0x58] sm:$0xff] %v928
    %952 = vst [vmem:[#allocation17 + $0x60] sm:$0xff] %v931
    %953 = vst [vmem:[#allocation17 + $0x68] sm:$0xff] %v933
    %954 = vst [vmem:[#allocation17 + $0x70] sm:$0xff] %v936
    %955 = vst [vmem:[#allocation17 + $0x78] sm:$0xff] %v938
    %v956 = vpack.c.bf16 %v903, %v901
    %v957 = vpack.c.bf16 %v908, %v906
    %v958 = vpack.c.bf16 %v913, %v911
    %v959 = vpack.c.bf16 %v918, %v916
    %v960 = vpack.c.bf16 %v923, %v921
    %v961 = vpack.c.bf16 %v928, %v926
    %v962 = vpack.c.bf16 %v933, %v931
    %v963 = vpack.c.bf16 %v938, %v936
    %v964 = vld [vmem:[#allocation13] sm:$0xf]
    %v965 = vld [vmem:[#allocation13 + $0x4] sm:$0xf]
    %v966 = vld [vmem:[#allocation13 + $0x8] sm:$0xf]
    %v967 = vld [vmem:[#allocation13 + $0xc] sm:$0xf]
    %v968 = vld [vmem:[#allocation13 + $0x10] sm:$0xf]
    %v969 = vld [vmem:[#allocation13 + $0x14] sm:$0xf]
    %v970 = vld [vmem:[#allocation13 + $0x18] sm:$0xf]
    %v971 = vld [vmem:[#allocation13 + $0x1c] sm:$0xf]
    %v972 = vld [vmem:[#allocation13 + $0x20] sm:$0xf]
    %v973 = vld [vmem:[#allocation13 + $0x24] sm:$0xf]
    %v974 = vld [vmem:[#allocation13 + $0x28] sm:$0xf]
    %v975 = vld [vmem:[#allocation13 + $0x2c] sm:$0xf]
    %v976 = vld [vmem:[#allocation13 + $0x30] sm:$0xf]
    %v977 = vld [vmem:[#allocation13 + $0x34] sm:$0xf]
    %v978 = vld [vmem:[#allocation13 + $0x38] sm:$0xf]
    %v979 = vld [vmem:[#allocation13 + $0x3c] sm:$0xf]
    %v996 = vunpack.c.l.b16 %v964
    %v997 = vunpack.c.l.b16 %v965
    %v998 = vunpack.c.l.b16 %v966
    %v999 = vunpack.c.l.b16 %v967
    %v1000 = vunpack.c.l.b16 %v968
    %v1001 = vunpack.c.l.b16 %v969
    %v1002 = vunpack.c.l.b16 %v970
    %v1003 = vunpack.c.l.b16 %v971
    %v1004 = vunpack.c.l.b16 %v972
    %v1005 = vunpack.c.l.b16 %v973
    %v1006 = vunpack.c.l.b16 %v974
    %v1007 = vunpack.c.l.b16 %v975
    %v1008 = vunpack.c.l.b16 %v976
    %v1009 = vunpack.c.l.b16 %v977
    %v1010 = vunpack.c.l.b16 %v978
    %v1011 = vunpack.c.l.b16 %v979
    %v1012 = vpack.c.b16 %v997, %v996
    %v1013 = vpack.c.b16 %v999, %v998
    %v1014 = vpack.c.b16 %v1001, %v1000
    %v1015 = vpack.c.b16 %v1003, %v1002
    %v1016 = vpack.c.b16 %v1005, %v1004
    %v1017 = vpack.c.b16 %v1007, %v1006
    %v1018 = vpack.c.b16 %v1009, %v1008
    %v1019 = vpack.c.b16 %v1011, %v1010
    %1028 = vmatpush.bf16.msra.mxu0 %v1019
    %1029 = vmatpush.bf16.msra.mxu0 %v1018
    %1030 = vmatpush.bf16.msra.mxu0 %v1017
    %1031 = vmatpush.bf16.msra.mxu0 %v1016
    %1032 = vmatpush.bf16.msra.mxu0 %v1015
    %1033 = vmatpush.bf16.msra.mxu0 %v1014
    %1034 = vmatpush.bf16.msra.mxu0 %v1013
    %1035 = vmatpush.bf16.msra.mxu0 %v1012
    %1036 = vmatmul.bf16.gmra.mxu0 %v956
    %v1037 = vpop.f32.mrf.mxu0
    %v1038 = vadd.f32 0.0, %v1037
    %v1039 = vpop.f32.mrf.mxu0
    %v1040 = vadd.f32 0.0, %v1039
    %1041 = vmatmul.bf16.gmra.mxu0 %v957
    %v1042 = vpop.f32.mrf.mxu0
    %v1043 = vadd.f32 0.0, %v1042
    %v1044 = vpop.f32.mrf.mxu0
    %v1045 = vadd.f32 0.0, %v1044
    %1046 = vmatmul.bf16.gmra.mxu0 %v958
    %v1047 = vpop.f32.mrf.mxu0
    %v1048 = vadd.f32 0.0, %v1047
    %v1049 = vpop.f32.mrf.mxu0
    %v1050 = vadd.f32 0.0, %v1049
    %1051 = vmatmul.bf16.gmra.mxu0 %v959
    %v1052 = vpop.f32.mrf.mxu0
    %v1053 = vadd.f32 0.0, %v1052
    %v1054 = vpop.f32.mrf.mxu0
    %v1055 = vadd.f32 0.0, %v1054
    %1056 = vmatmul.bf16.gmra.mxu0 %v960
    %v1057 = vpop.f32.mrf.mxu0
    %v1058 = vadd.f32 0.0, %v1057
    %v1059 = vpop.f32.mrf.mxu0
    %v1060 = vadd.f32 0.0, %v1059
    %1061 = vmatmul.bf16.gmra.mxu0 %v961
    %v1062 = vpop.f32.mrf.mxu0
    %v1063 = vadd.f32 0.0, %v1062
    %v1064 = vpop.f32.mrf.mxu0
    %v1065 = vadd.f32 0.0, %v1064
    %1066 = vmatmul.bf16.gmra.mxu0 %v962
    %v1067 = vpop.f32.mrf.mxu0
    %v1068 = vadd.f32 0.0, %v1067
    %v1069 = vpop.f32.mrf.mxu0
    %v1070 = vadd.f32 0.0, %v1069
    %1071 = vmatmul.bf16.gmra.mxu0 %v963
    %v1072 = vpop.f32.mrf.mxu0
    %v1073 = vadd.f32 0.0, %v1072
    %v1074 = vpop.f32.mrf.mxu0
    %v1075 = vadd.f32 0.0, %v1074
    %1076 = vdwg.mxu0
    %v1077 = vpack.c.bf16 %v1040, %v1038
    %v1078 = vpack.c.bf16 %v1045, %v1043
    %v1079 = vpack.c.bf16 %v1050, %v1048
    %v1080 = vpack.c.bf16 %v1055, %v1053
    %v1081 = vpack.c.bf16 %v1060, %v1058
    %v1082 = vpack.c.bf16 %v1065, %v1063
    %v1083 = vpack.c.bf16 %v1070, %v1068
    %v1084 = vpack.c.bf16 %v1075, %v1073
    %1085 = vmatpush.bf16.msra.mxu0 %v1084
    %1086 = vmatpush.bf16.msra.mxu0 %v1083
    %1087 = vmatpush.bf16.msra.mxu0 %v1082
    %1088 = vmatpush.bf16.msra.mxu0 %v1081
    %1089 = vmatpush.bf16.msra.mxu0 %v1080
    %1090 = vmatpush.bf16.msra.mxu0 %v1079
    %1091 = vmatpush.bf16.msra.mxu0 %v1078
    %1092 = vmatpush.bf16.msra.mxu0 %v1077
    %1093 = vmatmul.bf16.gmra.mxu0 %v875
    %v1094 = vpop.f32.mrf.mxu0
    %v1095 = vadd.f32 0.0, %v1094
    %v1096 = vpop.f32.mrf.mxu0
    %v1097 = vadd.f32 0.0, %v1096
    %1098 = vmatmul.bf16.gmra.mxu0 %v876
    %v1099 = vpop.f32.mrf.mxu0
    %v1100 = vadd.f32 0.0, %v1099
    %v1101 = vpop.f32.mrf.mxu0
    %v1102 = vadd.f32 0.0, %v1101
    %1103 = vmatmul.bf16.gmra.mxu0 %v877
    %v1104 = vpop.f32.mrf.mxu0
    %v1105 = vadd.f32 0.0, %v1104
    %v1106 = vpop.f32.mrf.mxu0
    %v1107 = vadd.f32 0.0, %v1106
    %1108 = vmatmul.bf16.gmra.mxu0 %v878
    %v1109 = vpop.f32.mrf.mxu0
    %v1110 = vadd.f32 0.0, %v1109
    %v1111 = vpop.f32.mrf.mxu0
    %v1112 = vadd.f32 0.0, %v1111
    %1113 = vmatmul.bf16.gmra.mxu0 %v879
    %v1114 = vpop.f32.mrf.mxu0
    %v1115 = vadd.f32 0.0, %v1114
    %v1116 = vpop.f32.mrf.mxu0
    %v1117 = vadd.f32 0.0, %v1116
    %1118 = vmatmul.bf16.gmra.mxu0 %v880
    %v1119 = vpop.f32.mrf.mxu0
    %v1120 = vadd.f32 0.0, %v1119
    %v1121 = vpop.f32.mrf.mxu0
    %v1122 = vadd.f32 0.0, %v1121
    %1123 = vmatmul.bf16.gmra.mxu0 %v881
    %v1124 = vpop.f32.mrf.mxu0
    %v1125 = vadd.f32 0.0, %v1124
    %v1126 = vpop.f32.mrf.mxu0
    %v1127 = vadd.f32 0.0, %v1126
    %1128 = vmatmul.bf16.gmra.mxu0 %v882
    %v1129 = vpop.f32.mrf.mxu0
    %v1130 = vadd.f32 0.0, %v1129
    %v1131 = vpop.f32.mrf.mxu0
    %v1132 = vadd.f32 0.0, %v1131
    %1133 = vdwg.mxu0
    %vm1134 = vcmp.gt.f32.partialorder %v1095, 0.0
    %vm1135 = vcmp.gt.f32.partialorder %v1097, 0.0
    %vm1136 = vcmp.gt.f32.partialorder %v1100, 0.0
    %vm1137 = vcmp.gt.f32.partialorder %v1102, 0.0
    %vm1138 = vcmp.gt.f32.partialorder %v1105, 0.0
    %vm1139 = vcmp.gt.f32.partialorder %v1107, 0.0
    %vm1140 = vcmp.gt.f32.partialorder %v1110, 0.0
    %vm1141 = vcmp.gt.f32.partialorder %v1112, 0.0
    %vm1142 = vcmp.gt.f32.partialorder %v1115, 0.0
    %vm1143 = vcmp.gt.f32.partialorder %v1117, 0.0
    %vm1144 = vcmp.gt.f32.partialorder %v1120, 0.0
    %vm1145 = vcmp.gt.f32.partialorder %v1122, 0.0
    %vm1146 = vcmp.gt.f32.partialorder %v1125, 0.0
    %vm1147 = vcmp.gt.f32.partialorder %v1127, 0.0
    %vm1148 = vcmp.gt.f32.partialorder %v1130, 0.0
    %vm1149 = vcmp.gt.f32.partialorder %v1132, 0.0
    %v1150 = vmul.f32 %v1095, 0.2
    %v1151 = vmul.f32 %v1097, 0.2
    %v1152 = vmul.f32 %v1100, 0.2
    %v1153 = vmul.f32 %v1102, 0.2
    %v1154 = vmul.f32 %v1105, 0.2
    %v1155 = vmul.f32 %v1107, 0.2
    %v1156 = vmul.f32 %v1110, 0.2
    %v1157 = vmul.f32 %v1112, 0.2
    %v1158 = vmul.f32 %v1115, 0.2
    %v1159 = vmul.f32 %v1117, 0.2
    %v1160 = vmul.f32 %v1120, 0.2
    %v1161 = vmul.f32 %v1122, 0.2
    %v1162 = vmul.f32 %v1125, 0.2
    %v1163 = vmul.f32 %v1127, 0.2
    %v1164 = vmul.f32 %v1130, 0.2
    %v1165 = vmul.f32 %v1132, 0.2
    %v1166 = vsel %vm1134, %v1095, %v1150
    %v1167 = vsel %vm1135, %v1097, %v1151
    %v1168 = vsel %vm1136, %v1100, %v1152
    %v1169 = vsel %vm1137, %v1102, %v1153
    %v1170 = vsel %vm1138, %v1105, %v1154
    %v1171 = vsel %vm1139, %v1107, %v1155
    %v1172 = vsel %vm1140, %v1110, %v1156
    %v1173 = vsel %vm1141, %v1112, %v1157
    %v1174 = vsel %vm1142, %v1115, %v1158
    %v1175 = vsel %vm1143, %v1117, %v1159
    %v1176 = vsel %vm1144, %v1120, %v1160
    %v1177 = vsel %vm1145, %v1122, %v1161
    %v1178 = vsel %vm1146, %v1125, %v1162
    %v1179 = vsel %vm1147, %v1127, %v1163
    %v1180 = vsel %vm1148, %v1130, %v1164
    %v1181 = vsel %vm1149, %v1132, %v1165
    %1182 = vst [vmem:[#allocation18] sm:$0xff] %v1166
    %1183 = vst [vmem:[#allocation18 + $0x8] sm:$0xff] %v1167
    %1184 = vst [vmem:[#allocation18 + $0x10] sm:$0xff] %v1168
    %1185 = vst [vmem:[#allocation18 + $0x18] sm:$0xff] %v1169
    %1186 = vst [vmem:[#allocation18 + $0x20] sm:$0xff] %v1170
    %1187 = vst [vmem:[#allocation18 + $0x28] sm:$0xff] %v1171
    %1188 = vst [vmem:[#allocation18 + $0x30] sm:$0xff] %v1172
    %1189 = vst [vmem:[#allocation18 + $0x38] sm:$0xff] %v1173
    %1190 = vst [vmem:[#allocation18 + $0x40] sm:$0xff] %v1174
    %1191 = vst [vmem:[#allocation18 + $0x48] sm:$0xff] %v1175
    %1192 = vst [vmem:[#allocation18 + $0x50] sm:$0xff] %v1176
    %1193 = vst [vmem:[#allocation18 + $0x58] sm:$0xff] %v1177
    %1194 = vst [vmem:[#allocation18 + $0x60] sm:$0xff] %v1178
    %1195 = vst [vmem:[#allocation18 + $0x68] sm:$0xff] %v1179
    %1196 = vst [vmem:[#allocation18 + $0x70] sm:$0xff] %v1180
    %1197 = vst [vmem:[#allocation18 + $0x78] sm:$0xff] %v1181
    // Predicated region
    $region58: #{tpu_custom_call.1} parent=1 // pred_check
      _
    $region59: #{tpu_custom_call.1} parent=1 // pred_check_branch
      %1199 = sbr.rel (0) target = $region61
    $region60: #{tpu_custom_call.1} parent=1 // pred_region
      %1201 = vsyncadd [#allocation4], 0
      %s1202 = sshll.u32 [#allocation14], 4
      %s1203 = int_to_ptr.vmem [resolvable:$true] %s1202
      %s1204 = sshll.u32 %s7, 4
      %s1205 = int_to_ptr.hbm [resolvable:$true] %s1204
      %1210 = dma.vmem_to_hbm [thread:$0]  %s1203, 2048, %s1205, [#allocation4], 128, 128, 8
    $region61: #{tpu_custom_call.1} parent=1 // pred_fallthru
      _
    // Predicated region
    $region62: #{tpu_custom_call.1} parent=1 // pred_check
      _
    $region63: #{tpu_custom_call.1} parent=1 // pred_check_branch
      %1212 = sbr.rel (0) target = $region65
    $region64: #{tpu_custom_call.1} parent=1 // pred_region
      %1214 = vsyncadd [#allocation16], 0
      %s1215 = sshll.u32 [#allocation15], 4
      %s1216 = int_to_ptr.vmem [resolvable:$true] %s1215
      %s1217 = sshll.u32 %s8, 4
      %s1218 = int_to_ptr.hbm [resolvable:$true] %s1217
      %1223 = dma.vmem_to_hbm [thread:$0]  %s1216, 2048, %s1218, [#allocation16], 128, 128, 8
    $region65: #{tpu_custom_call.1} parent=1 // pred_fallthru
      _
    // Predicated region
    $region66: #{tpu_custom_call.1} parent=1 // pred_check
      _
    $region67: #{tpu_custom_call.1} parent=1 // pred_check_branch
      %1225 = sbr.rel (0) target = $region69
    $region68: #{tpu_custom_call.1} parent=1 // pred_region
      %1227 = vsyncadd [#allocation16], 0
      %s1228 = sshll.u32 [#allocation17], 4
      %s1229 = int_to_ptr.vmem [resolvable:$true] %s1228
      %s1230 = sshll.u32 %s9, 4
      %s1231 = int_to_ptr.hbm [resolvable:$true] %s1230
      %1236 = dma.vmem_to_hbm [thread:$0]  %s1229, 2048, %s1231, [#allocation16], 128, 128, 8
    $region69: #{tpu_custom_call.1} parent=1 // pred_fallthru
      _
    // Predicated region
    $region70: #{tpu_custom_call.1} parent=1 // pred_check
      _
    $region71: #{tpu_custom_call.1} parent=1 // pred_check_branch
      %1238 = sbr.rel (0) target = $region73
    $region72: #{tpu_custom_call.1} parent=1 // pred_region
      %1240 = vsyncadd [#allocation19], 0
      %s1241 = sshll.u32 [#allocation18], 4
      %s1242 = int_to_ptr.vmem [resolvable:$true] %s1241
      %s1243 = sshll.u32 %s10, 4
      %s1244 = int_to_ptr.hbm [resolvable:$true] %s1243
      %1249 = dma.vmem_to_hbm [thread:$0]  %s1242, 2048, %s1244, [#allocation19], 128, 128, 8
    $region73: #{tpu_custom_call.1} parent=1 // pred_fallthru
      _
    // Predicated region
    $region74: #{tpu_custom_call.1} parent=1 // pred_check
      _
    $region75: #{tpu_custom_call.1} parent=1 // pred_check_branch
      %1251 = sbr.rel (0) target = $region77
    $region76: #{tpu_custom_call.1} parent=1 // pred_region
      %1253 = dma.done [#allocation4], 2048
    $region77: #{tpu_custom_call.1} parent=1 // pred_fallthru
      _
    // Predicated region
    $region78: #{tpu_custom_call.1} parent=1 // pred_check
      _
    $region79: #{tpu_custom_call.1} parent=1 // pred_check_branch
      %1255 = sbr.rel (0) target = $region81
    $region80: #{tpu_custom_call.1} parent=1 // pred_region
      %1257 = dma.done [#allocation16], 2048
    $region81: #{tpu_custom_call.1} parent=1 // pred_fallthru
      _
    // Predicated region
    $region82: #{tpu_custom_call.1} parent=1 // pred_check
      _
    $region83: #{tpu_custom_call.1} parent=1 // pred_check_branch
      %1259 = sbr.rel (0) target = $region85
    $region84: #{tpu_custom_call.1} parent=1 // pred_region
      %1261 = dma.done [#allocation16], 2048
    $region85: #{tpu_custom_call.1} parent=1 // pred_fallthru
      _
    // Predicated region
    $region86: #{tpu_custom_call.1} parent=1 // pred_check
      _
    $region87: #{tpu_custom_call.1} parent=1 // pred_check_branch
      %1263 = sbr.rel (0) target = $region89
    $region88: #{tpu_custom_call.1} parent=1 // pred_region
      %1265 = dma.done [#allocation19], 2048
    $region89: #{tpu_custom_call.1} parent=1 // pred_fallthru
      _
    %1266 = vsyncpa [#allocation3], 1
    %1267 = vsyncpa [#allocation6], 1
    %1268 = vsyncpa [#allocation9], 1
    %1269 = vsyncpa [#allocation12], 1
    %1270 = vsyncpa [#allocation4], 1
    %1271 = vsyncpa [#allocation16], 1
    %1272 = vsyncpa [#allocation19], 1

</llo_original>
